<compile_context>
chip_gen: v7x
topology: tpu7x:2x2x1
jax: 0.10.0
libtpu: 0.0.40
codegen_flags: <defaults>
</compile_context>

<pallas_src>
import jax
import jax.numpy as jnp
from jax import lax
from jax.experimental import pallas as pl
from jax.experimental.pallas import tpu as pltpu


# ----------------------------------------------------------------------------
# helpers
# ----------------------------------------------------------------------------
def _round_up(x, m):
    return ((x + m - 1) // m) * m


def _cdiv(a, b):
    return -(-a // b)


_VMEM_BUDGET = 24 * 1024 * 1024     # conservative; vmem_limit set to 48 MiB below


def _pack_factor(cout, k_pad):
    """Row-group packing factor: pack r output rows into the 128-lane dim."""
    if cout >= 128:
        return 1
    r = max(1, 128 // cout)
    # keep the two replicated (r*K_pad, r*Cout) bf16 weight matrices small
    while r > 1 and 2 * (r * k_pad) * (r * cout) * 2 > 8 * 1024 * 1024:
        r //= 2
    return max(r, 1)


def _choose_tm(m_pack, kr, cr, out_bytes, budget=_VMEM_BUDGET):
    # Big tiles amortise the ~0.35us per-grid-step overhead; keep >=4 grid
    # steps when M allows (v7x shares the "parallel" axis across 2 TCs) and
    # stay inside a conservative VMEM budget.
    if m_pack >= 8 * 1024:
        tm = 1024                                   # large-M: v5e/v6e roofline win
    elif m_pack >= 4 * 512:
        tm = 512
    elif m_pack >= 4 * 16:
        tm = _round_up(_cdiv(m_pack, 4), 16)        # >=4 steps for 2-TC balance
    else:
        tm = _round_up(max(16, _cdiv(m_pack, 2)), 16)

    def vmem(t):
        return (2 * t * kr * 2 +          # patches tile (bf16, double-buffered)
                2 * t * cr * 2 +          # zeta tile    (bf16, double-buffered)
                2 * t * cr * out_bytes +  # output tile  (double-buffered)
                2 * kr * cr * 2 +         # w_mean + w_var (single-buffered, VMEM whole)
                2 * cr * 4)               # bias rows (f32)

    while tm > 16 and vmem(tm) > budget:
        tm = _round_up(max(16, tm // 2), 16)
    return tm


# ----------------------------------------------------------------------------
# Pallas kernel: two fused GEMMs + local-reparameterisation epilogue
# ----------------------------------------------------------------------------
def _bayes_conv_kernel(p_ref, zeta_ref, wmean_ref, wvar_ref, bmu_ref, bs2_ref,
                       o_ref):
    p = p_ref[...]                                             # (tm, KR) bf16
    psi = jnp.dot(p, wmean_ref[...],
                  preferred_element_type=jnp.float32) + bmu_ref[...]
    psq = p * p                                                # bf16 square (VPU)
    delta = jnp.dot(psq, wvar_ref[...],
                    preferred_element_type=jnp.float32) + bs2_ref[...]
    zeta = zeta_ref[...].astype(jnp.float32)
    # f32 epilogue in-register; single cast at the store.
    o_ref[...] = (psi + jnp.sqrt(delta) * zeta).astype(o_ref.dtype)


# ----------------------------------------------------------------------------
# Wrapper: reparameterisation (hoisted), im2col glue, packing, pallas_call
# ----------------------------------------------------------------------------
def bayesian_conv2d_forward(x_nchw, params, z, key, *,
                            out_dtype=jnp.float32, out_layout="NCHW"):
    N, Cin, H, W = x_nchw.shape
    Cout, _, KH, KW = params["weight_mu"].shape
    OH, OW = H - KH + 1, W - KW + 1
    M = N * OH * OW
    K = KH * KW * Cin

    # ---- weight-side reparameterisation: once, in f32 (hoisted out of kernel) --
    alpha = jax.nn.sigmoid(params["lambdal"])                  # alpha_q
    wsig = jax.nn.softplus(params["weight_rho"])               # stable softplus
    bsig = jax.nn.softplus(params["bias_rho"])
    zc = z[:, None, None, None]
    w_mean = params["weight_mu"] * zc * alpha
    w_var = alpha * (wsig ** 2 + (1.0 - alpha) * params["weight_mu"] ** 2 * zc ** 2)

    # ---- layout: pad K to 16 only; pack r output rows into the lane dim --------
    K_pad = _round_up(K, 16)
    r = _pack_factor(Cout, K_pad)
    KR = r * K_pad
    CR = r * Cout

    def to_mat(w):   # (Cout,Cin,KH,KW) -> (K_pad, Cout); row = (kh*KW+kw)*Cin + ci
        m = jnp.transpose(w, (2, 3, 1, 0)).reshape(K, Cout).astype(jnp.float32)
        return jnp.pad(m, ((0, K_pad - K), (0, 0)))

    eye_r = jnp.eye(r, dtype=jnp.float32)
    wmean_blk = jnp.kron(eye_r, to_mat(w_mean)).astype(jnp.bfloat16)    # (KR, CR)
    wvar_blk = jnp.kron(eye_r, to_mat(w_var)).astype(jnp.bfloat16)      # (KR, CR)
    bmu_row = jnp.tile(params["bias_mu"].astype(jnp.float32), r).reshape(1, CR)
    bs2_row = jnp.tile(bsig.astype(jnp.float32) ** 2, r).reshape(1, CR)

    # ---- im2col in bf16 (wrapper glue) ------------------------------------------
    x_nhwc = jnp.transpose(x_nchw, (0, 2, 3, 1)).astype(jnp.bfloat16)
    cols = [x_nhwc[:, kh:kh + OH, kw:kw + OW, :]
            for kh in range(KH) for kw in range(KW)]
    patches = jnp.stack(cols, axis=3).reshape(M, K)
    patches = jnp.pad(patches, ((0, 0), (0, K_pad - K)))

    # ---- tile size / padding in packed-row units --------------------------------
    M_pack = _cdiv(M, r)
    tm = _choose_tm(M_pack, KR, CR, jnp.dtype(out_dtype).itemsize)
    Mp_pack = _round_up(M_pack, tm)
    M_pad = Mp_pack * r

    patches = jnp.pad(patches, ((0, M_pad - M), (0, 0))).reshape(Mp_pack, KR)

    # zeta ~ N(0,1), drawn once, streamed in as bf16 (never written back out).
    zeta_f32 = jax.random.normal(key, (M_pad, Cout), dtype=jnp.float32)
    zeta_bf = zeta_f32.astype(jnp.bfloat16)
    zeta_packed = zeta_bf.reshape(Mp_pack, CR)

    grid = (Mp_pack // tm,)
    out_packed = pl.pallas_call(
        _bayes_conv_kernel,
        out_shape=jax.ShapeDtypeStruct((Mp_pack, CR), out_dtype),
        grid=grid,
        in_specs=[
            pl.BlockSpec((tm, KR), lambda i: (i, 0)),          # packed patches (bf16)
            pl.BlockSpec((tm, CR), lambda i: (i, 0)),          # packed zeta    (bf16)
            pl.BlockSpec(memory_space=pltpu.MemorySpace.VMEM),  # w_mean (whole, single-buffered)
            pl.BlockSpec(memory_space=pltpu.MemorySpace.VMEM),  # w_var
            pl.BlockSpec(memory_space=pltpu.MemorySpace.VMEM),  # bias_mu row
            pl.BlockSpec(memory_space=pltpu.MemorySpace.VMEM),  # bias_sigma^2 row
        ],
        out_specs=pl.BlockSpec((tm, CR), lambda i: (i, 0)),
        compiler_params=pltpu.CompilerParams(
            dimension_semantics=("parallel",),
            vmem_limit_bytes=48 * 1024 * 1024,
        ),
    )(patches, zeta_packed, wmean_blk, wvar_blk, bmu_row, bs2_row)

    # Contiguous (free) unpacking of the lane-dense output.
    out_flat = out_packed.reshape(M_pad, Cout)[:M]
    out_nhwc = out_flat.reshape(N, OH, OW, Cout)
    # zeta actually used by the kernel (bf16-rounded), for reference / backward.
    zeta_used = zeta_bf.astype(jnp.float32)[:M]

    if out_layout == "NHWC":
        # Avoids the extra HBM transpose pass (review item) when the consumer
        # can take NHWC.
        return out_nhwc, zeta_used
    return jnp.transpose(out_nhwc, (0, 3, 1, 2)), zeta_used


# ----------------------------------------------------------------------------
# sample_z: q0 Gaussian + normalizing flow (plain JAX glue, tiny vectors)
# ----------------------------------------------------------------------------
def sample_z(params, key):
    q0_std = jnp.sqrt(jnp.exp(params["q0_log_var"]))
    eps = jax.random.normal(key, q0_std.shape, dtype=jnp.float32)
    z = params["q0_mean"] + q0_std * eps
    # TODO(synk): PropagateFlow / IAF is not defined in the reference source;
    # using a minimal masked (autoregressive) affine IAF with the same I/O shape.
    for (Wm, bm, Ws, bs) in params["z_flow"]:
        d = z.shape[0]
        mask = jnp.tril(jnp.ones((d, d), jnp.float32), k=-1)
        m = z @ (Wm * mask) + bm
        s = z @ (Ws * mask) + bs
        sig = jax.nn.sigmoid(s)
        z = sig * z + (1.0 - sig) * m
    return z


# ----------------------------------------------------------------------------
# Deterministic parameter initialisation (mirrors the PyTorch __init__ shapes)
# ----------------------------------------------------------------------------
def init_params(key, in_channels, out_channels, kernel, num_transforms):
    KH, KW = kernel
    wshape = (out_channels, in_channels, KH, KW)
    ks = jax.random.split(key, 11)
    params = {
        "weight_mu": jax.random.uniform(ks[0], wshape, jnp.float32, -0.2, 0.2),
        "weight_rho": -9.0 + 0.1 * jax.random.normal(ks[1], wshape, jnp.float32),
        "lambdal": jax.random.uniform(ks[2], wshape, jnp.float32, -10.0, 15.0),
        "bias_mu": jax.random.uniform(ks[3], (out_channels,), jnp.float32, -0.2, 0.2),
        "bias_rho": -9.0 + 1.0 * jax.random.normal(ks[4], (out_channels,), jnp.float32),
        "q0_mean": jax.random.normal(ks[5], (out_channels,), jnp.float32),
        "q0_log_var": -9.0 + jax.random.normal(ks[6], (out_channels,), jnp.float32),
        "r0_c": jax.random.normal(ks[7], (out_channels,), jnp.float32),
        "r0_b1": jax.random.normal(ks[8], (out_channels,), jnp.float32),
        "r0_b2": jax.random.normal(ks[9], (out_channels,), jnp.float32),
    }
    fkeys = jax.random.split(ks[10], num_transforms * 3)
    z_flow = []
    for t in range(num_transforms):
        Wm = 0.1 * jax.random.normal(fkeys[3 * t], (out_channels, out_channels), jnp.float32)
        bm = 0.1 * jax.random.normal(fkeys[3 * t + 1], (out_channels,), jnp.float32)
        Ws = 0.1 * jax.random.normal(fkeys[3 * t + 2], (out_channels, out_channels), jnp.float32)
        bs = jnp.ones((out_channels,), jnp.float32)
        z_flow.append((Wm, bm, Ws, bs))
    params["z_flow"] = z_flow
    return params


# ----------------------------------------------------------------------------
# Pure-JAX reference (F.conv2d formulation, mirroring the kernel's bf16
# operand rounding so the check is numerically tight)
# ----------------------------------------------------------------------------
def reference_forward(x, params, z, zeta_mat):
    alpha = jax.nn.sigmoid(params["lambdal"])
    wsig = jax.nn.softplus(params["weight_rho"])
    bsig = jax.nn.softplus(params["bias_rho"])
    zc = z[:, None, None, None]
    w_mean = (params["weight_mu"] * zc * alpha
              ).astype(jnp.bfloat16).astype(jnp.float32)
    w_var = (alpha * (wsig ** 2 + (1.0 - alpha) * params["weight_mu"] ** 2 * zc ** 2)
             ).astype(jnp.bfloat16).astype(jnp.float32)
    xb16 = x.astype(jnp.bfloat16)
    xb = xb16.astype(jnp.float32)
    x2b = (xb16 * xb16).astype(jnp.float32)       # kernel squares in bf16
    dn = ("NCHW", "OIHW", "NCHW")
    psi = lax.conv_general_dilated(
        xb, w_mean, (1, 1), "VALID", dimension_numbers=dn,
        precision=lax.Precision.HIGHEST) + params["bias_mu"][None, :, None, None]
    delta = lax.conv_general_dilated(
        x2b, w_var, (1, 1), "VALID", dimension_numbers=dn,
        precision=lax.Precision.HIGHEST) + (bsig ** 2)[None, :, None, None]
    N = x.shape[0]
    Cout, _, KH, KW = w_mean.shape
    OH, OW = x.shape[2] - KH + 1, x.shape[3] - KW + 1
    zeta = zeta_mat.reshape(N, OH, OW, Cout).transpose(0, 3, 1, 2)
    return psi + jnp.sqrt(delta) * zeta


if __name__ == "__main__":
    key = jax.random.PRNGKey(0)
    k_param, k_x, k_eps, k_zeta = jax.random.split(key, 4)

    in_channels, out_channels, kernel_size, num_transforms = 4, 8, 3, 2
    N, H, W = 2, 16, 16

    params = init_params(k_param, in_channels, out_channels,
                         (kernel_size, kernel_size), num_transforms)
    x = jax.random.normal(k_x, (N, in_channels, H, W), dtype=jnp.float32)

    z = sample_z(params, k_eps)
    out, zeta = bayesian_conv2d_forward(x, params, z, k_zeta)
    out = jax.block_until_ready(out)

    OH = H - kernel_size + 1
    assert out.shape == (N, out_channels, OH, OH), out.shape
    assert out.dtype == jnp.float32
    assert bool(jnp.all(jnp.isfinite(out)))

    ref = reference_forward(x, params, z, zeta)
    assert bool(jnp.allclose(out, ref, atol=2e-3, rtol=2e-3)), "mismatch vs reference"

    print("KERNEL_OK")
</pallas_src>

<mosaic_0001>
module attributes {stable_mosaic.version = 11 : i64} {
  func.func @_bayes_conv_kernel(%arg0: i32, %arg1: memref<16x768xbf16, #tpu.memory_space<vmem>>, %arg2: memref<16x128xbf16, #tpu.memory_space<vmem>>, %arg3: memref<768x128xbf16, #tpu.memory_space<vmem>>, %arg4: memref<768x128xbf16, #tpu.memory_space<vmem>>, %arg5: memref<1x128xf32, #tpu.memory_space<vmem>>, %arg6: memref<1x128xf32, #tpu.memory_space<vmem>>, %arg7: memref<16x128xf32, #tpu.memory_space<vmem>>) attributes {dimension_semantics = [#tpu.dimension_semantics<parallel>], iteration_bounds = array<i64: 2>, scalar_prefetch = 0 : i64, scratch_operands = 0 : i64, tpu.core_type = #tpu.core_type<tc>, window_params = [{transform_indices = @transform_0, window_bounds = array<i64: 16, 768>}, {transform_indices = @transform_1, window_bounds = array<i64: 16, 128>}, {pipeline_mode = #tpu.pipeline_mode<synchronous>, transform_indices = @transform_2, window_bounds = array<i64: 768, 128>}, {pipeline_mode = #tpu.pipeline_mode<synchronous>, transform_indices = @transform_3, window_bounds = array<i64: 768, 128>}, {pipeline_mode = #tpu.pipeline_mode<synchronous>, transform_indices = @transform_4, window_bounds = array<i64: 1, 128>}, {pipeline_mode = #tpu.pipeline_mode<synchronous>, transform_indices = @transform_5, window_bounds = array<i64: 1, 128>}, {transform_indices = @transform_6, window_bounds = array<i64: 16, 128>}]} {
    %c0 = arith.constant 0 : index
    %c0_0 = arith.constant 0 : index
    %0 = vector.load %arg1[%c0, %c0_0] : memref<16x768xbf16, #tpu.memory_space<vmem>>, vector<16x768xbf16>
    %c0_1 = arith.constant 0 : index
    %c0_2 = arith.constant 0 : index
    %1 = vector.load %arg3[%c0_1, %c0_2] : memref<768x128xbf16, #tpu.memory_space<vmem>>, vector<768x128xbf16>
    %cst = arith.constant dense<0.000000e+00> : vector<16x128xf32>
    %2 = tpu.matmul %0, %1, %cst {dimension_numbers = #tpu.dot_dimension_numbers<[1], [0], [0], [1], [0, 0, 1, 1], [], []>} : vector<16x768xbf16>, vector<768x128xbf16>, vector<16x128xf32> -> vector<16x128xf32>
    %c0_3 = arith.constant 0 : index
    %c0_4 = arith.constant 0 : index
    %3 = vector.load %arg5[%c0_3, %c0_4] : memref<1x128xf32, #tpu.memory_space<vmem>>, vector<1x128xf32>
    %4 = vector.broadcast %3 : vector<1x128xf32> to vector<16x128xf32>
    %5 = arith.addf %2, %4 : vector<16x128xf32>
    %6 = arith.mulf %0, %0 : vector<16x768xbf16>
    %c0_5 = arith.constant 0 : index
    %c0_6 = arith.constant 0 : index
    %7 = vector.load %arg4[%c0_5, %c0_6] : memref<768x128xbf16, #tpu.memory_space<vmem>>, vector<768x128xbf16>
    %cst_7 = arith.constant dense<0.000000e+00> : vector<16x128xf32>
    %8 = tpu.matmul %6, %7, %cst_7 {dimension_numbers = #tpu.dot_dimension_numbers<[1], [0], [0], [1], [0, 0, 1, 1], [], []>} : vector<16x768xbf16>, vector<768x128xbf16>, vector<16x128xf32> -> vector<16x128xf32>
    %c0_8 = arith.constant 0 : index
    %c0_9 = arith.constant 0 : index
    %9 = vector.load %arg6[%c0_8, %c0_9] : memref<1x128xf32, #tpu.memory_space<vmem>>, vector<1x128xf32>
    %10 = vector.broadcast %9 : vector<1x128xf32> to vector<16x128xf32>
    %11 = arith.addf %8, %10 : vector<16x128xf32>
    %c0_10 = arith.constant 0 : index
    %c0_11 = arith.constant 0 : index
    %12 = vector.load %arg2[%c0_10, %c0_11] : memref<16x128xbf16, #tpu.memory_space<vmem>>, vector<16x128xbf16>
    %13 = arith.extf %12 : vector<16x128xbf16> to vector<16x128xf32>
    %14 = math.sqrt %11 : vector<16x128xf32>
    %15 = arith.mulf %14, %13 : vector<16x128xf32>
    %16 = arith.addf %5, %15 : vector<16x128xf32>
    %c0_12 = arith.constant 0 : index
    %c0_13 = arith.constant 0 : index
    %17 = vector.load %arg7[%c0_12, %c0_13] : memref<16x128xf32, #tpu.memory_space<vmem>>, vector<16x128xf32>
    tpu.vector_store %arg7[%c0_12, %c0_13], %16 {strides = array<i32>} : memref<16x128xf32, #tpu.memory_space<vmem>>, vector<16x128xf32>,
    return
  }
  func.func @transform_0(%arg0: i32) -> (i32, i32) {
    %c0_i32 = arith.constant 0 : i32
    %c0_i32_0 = arith.constant 0 : i32
    return %arg0, %c0_i32 : i32, i32
  }
  func.func @transform_1(%arg0: i32) -> (i32, i32) {
    %c0_i32 = arith.constant 0 : i32
    %c0_i32_0 = arith.constant 0 : i32
    return %arg0, %c0_i32 : i32, i32
  }
  func.func @transform_2(%arg0: i32) -> (i32, i32) {
    %c0_i32 = arith.constant 0 : i32
    %c0_i32_0 = arith.constant 0 : i32
    %c0_i32_1 = arith.constant 0 : i32
    return %c0_i32, %c0_i32_0 : i32, i32
  }
  func.func @transform_3(%arg0: i32) -> (i32, i32) {
    %c0_i32 = arith.constant 0 : i32
    %c0_i32_0 = arith.constant 0 : i32
    %c0_i32_1 = arith.constant 0 : i32
    return %c0_i32, %c0_i32_0 : i32, i32
  }
  func.func @transform_4(%arg0: i32) -> (i32, i32) {
    %c0_i32 = arith.constant 0 : i32
    %c0_i32_0 = arith.constant 0 : i32
    %c0_i32_1 = arith.constant 0 : i32
    return %c0_i32, %c0_i32_0 : i32, i32
  }
  func.func @transform_5(%arg0: i32) -> (i32, i32) {
    %c0_i32 = arith.constant 0 : i32
    %c0_i32_0 = arith.constant 0 : i32
    %c0_i32_1 = arith.constant 0 : i32
    return %c0_i32, %c0_i32_0 : i32, i32
  }
  func.func @transform_6(%arg0: i32) -> (i32, i32) {
    %c0_i32 = arith.constant 0 : i32
    %c0_i32_0 = arith.constant 0 : i32
    return %arg0, %c0_i32 : i32, i32
  }
}

</mosaic_0001>

<llo_original>
// kernel: tpu_custom_call.1
$region0: #{tpu_custom_call.1}
  #allocation0 [shape = 'u32[]', space=smem, size = 0x4, offset = 0x4, fixed_abs, tag = 'smem constant byte address 0x4 - core index']
  #allocation1 [shape = 'u32[144,128]{1,0:T(1,128)}', space=vmem, size = 0x12000, scoped, tag = 'internal scratch']
  %s0 = inlined_call_operand.hbm [shape: bf16[32,768], index: 0, kind: input, shape index: {}]
  %s1 = inlined_call_operand.hbm [shape: bf16[32,128], index: 1, kind: input, shape index: {}]
  %s2 = inlined_call_operand.hbm [shape: bf16[768,128], index: 2, kind: input, shape index: {}]
  %s3 = inlined_call_operand.hbm [shape: bf16[768,128], index: 3, kind: input, shape index: {}]
  %s4 = inlined_call_operand.vmem [shape: f32[1,128], index: 4, kind: input, shape index: {}]
  %s5 = inlined_call_operand.vmem [shape: f32[1,128], index: 5, kind: input, shape index: {}]
  %s6 = inlined_call_operand.hbm [shape: f32[32,128], index: 6, kind: output, shape index: {}]
  %s7 = sld [smem:[#allocation0]]
  $region73: #{tpu_custom_call.1} parent=0
    _
  %s9 = ssub.s32 1, %s7
  %s10 = scalar_select 0, %s9, %s7
  $region1: #{tpu_custom_call.1} parent=0
    #allocation2 [shape = 'u8[49152]{0}', space=vmem, size = 0xc000, scoped, tag = 'input window, operand 0']
    #allocation3 [shape = 's32[2]{0}', space=sflag, size = 0x8, scoped, tag = 'scoped memory for tpu_custom_call.1']
    #allocation4 [shape = 's32[2]{0}', space=sflag, size = 0x8, scoped, tag = 'scoped memory for tpu_custom_call.1']
    #allocation5 [shape = 'u8[8192]{0}', space=vmem, size = 0x2000, scoped, tag = 'input window, operand 1']
    #allocation6 [shape = 's32[2]{0}', space=sflag, size = 0x8, scoped, tag = 'scoped memory for tpu_custom_call.1']
    #allocation7 [shape = 'u8[196608]{0}', space=vmem, size = 0x30000, scoped, tag = 'input window, operand 2, single buffered']
    #allocation8 [shape = 'u8[196608]{0}', space=vmem, size = 0x30000, scoped, tag = 'input window, operand 3, single buffered']
    #allocation9 [shape = 's32[1]{0}', space=sflag, size = 0x4, scoped, tag = 'scoped memory for tpu_custom_call.1']
    #allocation10 [shape = 'u8[16384]{0}', space=vmem, size = 0x4000, scoped, tag = 'output window, operand 0']
    %11 = vsyncpa [#allocation3], 0
    %s12 = scalar_lea.sflag [#allocation3], 1
    %13 = vsyncpa %s12, 0
    %14 = vsyncpa [#allocation6], 0
    %s15 = scalar_lea.sflag [#allocation6], 1
    %16 = vsyncpa %s15, 0
    %17 = vsyncpa [#allocation9], 0
    %18 = vsyncpa [#allocation4], 0
    %s19 = scalar_lea.sflag [#allocation4], 1
    %20 = vsyncpa %s19, 0
    loop: start=0, step=1, limit=4
    $region2: #{tpu_custom_call.1} parent=1 // loop_pre_header
      _
    $region3: #{tpu_custom_call.1} parent=1 // loop_header
      %s22 = sphi 0, %s26
      %p23 = scmp.ge.s32.totalorder %s22, 4
      %s32 = sphi 0, %s34
      %s35 = sphi 0, %s32
      %s36 = sphi 0, %s35
      %s52 = sphi 0, %s36
      %s58 = sphi 0, %s60
      %s61 = sphi 0, %s58
      %s62 = sphi 0, %s61
      %s78 = sphi 0, %s62
      %s82 = sphi 0, %s82
      %s84 = sphi 0, %s82
      %s85 = sphi 0, %s84
      %s99 = sphi 0, %s85
      %s103 = sphi 0, %s103
      %s105 = sphi 0, %s103
      %s106 = sphi 0, %s105
      %s120 = sphi 0, %s106
      %s124 = sphi 0, %s124
      %s126 = sphi 0, %s124
      %s127 = sphi 0, %s126
      %s141 = sphi 0, %s127
      %s145 = sphi 0, %s145
      %s147 = sphi 0, %s145
      %s148 = sphi 0, %s147
      %s162 = sphi 0, %s148
      %s168 = sphi 0, %s170
      %s171 = sphi 0, %s168
      %s172 = sphi 0, %s171
      %s188 = sphi 0, %s172
    $region4: #{tpu_custom_call.1} parent=1 // loop_header_branch
      %25 = sbr.rel (%p23) target = $region8
    $region5: #{tpu_custom_call.1} parent=1 // loop_body
      %s27 = ssub.s32 %s22, 1
      %s28 = ssub.s32 %s22, 2
      %s29 = sadd.s32 %s22, 1
      %s30 = ssub.s32 %s22, %s29
      %p31 = scmp.eq.s32.totalorder %s30, 0
      %s33 = sadd.s32 %s32, 1
      %s34 = scalar_select %p31, %s32, %s33
      %p37 = pneg %p31
      %p38 = scmp.eq.s32.totalorder %s22, 1
      %p39 = por %p37, %p38
      %p40 = scmp.ne.s32.totalorder %s32, %s35
      %p41 = scmp.eq.s32.totalorder %s22, 0
      %p42 = por %p40, %p41
      %p43 = scmp.ne.s32.totalorder %s32, %s35
      %p44 = scmp.eq.s32.totalorder %s27, 1
      %p45 = por %p43, %p44
      %p46 = scmp.ne.s32.totalorder %s35, %s36
      %p47 = scmp.eq.s32.totalorder %s27, 0
      %p48 = por %p46, %p47
      %p49 = scmp.ne.s32.totalorder %s35, %s36
      %p50 = scmp.eq.s32.totalorder %s28, 1
      %p51 = por %p49, %p50
      %p53 = scmp.ne.s32.totalorder %s36, %s52
      %p54 = scmp.eq.s32.totalorder %s28, 0
      %p55 = por %p53, %p54
      %s56 = ssub.s32 %s22, %s29
      %p57 = scmp.eq.s32.totalorder %s56, 0
      %s59 = sadd.s32 %s58, 1
      %s60 = scalar_select %p57, %s58, %s59
      %p63 = pneg %p57
      %p64 = scmp.eq.s32.totalorder %s22, 1
      %p65 = por %p63, %p64
      %p66 = scmp.ne.s32.totalorder %s58, %s61
      %p67 = scmp.eq.s32.totalorder %s22, 0
      %p68 = por %p66, %p67
      %p69 = scmp.ne.s32.totalorder %s58, %s61
      %p70 = scmp.eq.s32.totalorder %s27, 1
      %p71 = por %p69, %p70
      %p72 = scmp.ne.s32.totalorder %s61, %s62
      %p73 = scmp.eq.s32.totalorder %s27, 0
      %p74 = por %p72, %p73
      %p75 = scmp.ne.s32.totalorder %s61, %s62
      %p76 = scmp.eq.s32.totalorder %s28, 1
      %p77 = por %p75, %p76
      %p79 = scmp.ne.s32.totalorder %s62, %s78
      %p80 = scmp.eq.s32.totalorder %s28, 0
      %p81 = por %p79, %p80
      %s83 = sadd.s32 %s82, 1
      %p86 = scmp.eq.s32.totalorder %s22, 1
      %p87 = scmp.ne.s32.totalorder %s82, %s84
      %p88 = scmp.eq.s32.totalorder %s22, 0
      %p89 = por %p87, %p88
      %p90 = scmp.ne.s32.totalorder %s82, %s84
      %p91 = scmp.eq.s32.totalorder %s27, 1
      %p92 = por %p90, %p91
      %p93 = scmp.ne.s32.totalorder %s84, %s85
      %p94 = scmp.eq.s32.totalorder %s27, 0
      %p95 = por %p93, %p94
      %p96 = scmp.ne.s32.totalorder %s84, %s85
      %p97 = scmp.eq.s32.totalorder %s28, 1
      %p98 = por %p96, %p97
      %p100 = scmp.ne.s32.totalorder %s85, %s99
      %p101 = scmp.eq.s32.totalorder %s28, 0
      %p102 = por %p100, %p101
      %s104 = sadd.s32 %s103, 1
      %p107 = scmp.eq.s32.totalorder %s22, 1
      %p108 = scmp.ne.s32.totalorder %s103, %s105
      %p109 = scmp.eq.s32.totalorder %s22, 0
      %p110 = por %p108, %p109
      %p111 = scmp.ne.s32.totalorder %s103, %s105
      %p112 = scmp.eq.s32.totalorder %s27, 1
      %p113 = por %p111, %p112
      %p114 = scmp.ne.s32.totalorder %s105, %s106
      %p115 = scmp.eq.s32.totalorder %s27, 0
      %p116 = por %p114, %p115
      %p117 = scmp.ne.s32.totalorder %s105, %s106
      %p118 = scmp.eq.s32.totalorder %s28, 1
      %p119 = por %p117, %p118
      %p121 = scmp.ne.s32.totalorder %s106, %s120
      %p122 = scmp.eq.s32.totalorder %s28, 0
      %p123 = por %p121, %p122
      %s125 = sadd.s32 %s124, 1
      %p128 = scmp.eq.s32.totalorder %s22, 1
      %p129 = scmp.ne.s32.totalorder %s124, %s126
      %p130 = scmp.eq.s32.totalorder %s22, 0
      %p131 = por %p129, %p130
      %p132 = scmp.ne.s32.totalorder %s124, %s126
      %p133 = scmp.eq.s32.totalorder %s27, 1
      %p134 = por %p132, %p133
      %p135 = scmp.ne.s32.totalorder %s126, %s127
      %p136 = scmp.eq.s32.totalorder %s27, 0
      %p137 = por %p135, %p136
      %p138 = scmp.ne.s32.totalorder %s126, %s127
      %p139 = scmp.eq.s32.totalorder %s28, 1
      %p140 = por %p138, %p139
      %p142 = scmp.ne.s32.totalorder %s127, %s141
      %p143 = scmp.eq.s32.totalorder %s28, 0
      %p144 = por %p142, %p143
      %s146 = sadd.s32 %s145, 1
      %p149 = scmp.eq.s32.totalorder %s22, 1
      %p150 = scmp.ne.s32.totalorder %s145, %s147
      %p151 = scmp.eq.s32.totalorder %s22, 0
      %p152 = por %p150, %p151
      %p153 = scmp.ne.s32.totalorder %s145, %s147
      %p154 = scmp.eq.s32.totalorder %s27, 1
      %p155 = por %p153, %p154
      %p156 = scmp.ne.s32.totalorder %s147, %s148
      %p157 = scmp.eq.s32.totalorder %s27, 0
      %p158 = por %p156, %p157
      %p159 = scmp.ne.s32.totalorder %s147, %s148
      %p160 = scmp.eq.s32.totalorder %s28, 1
      %p161 = por %p159, %p160
      %p163 = scmp.ne.s32.totalorder %s148, %s162
      %p164 = scmp.eq.s32.totalorder %s28, 0
      %p165 = por %p163, %p164
      %s166 = ssub.s32 %s22, %s29
      %p167 = scmp.eq.s32.totalorder %s166, 0
      %s169 = sadd.s32 %s168, 1
      %s170 = scalar_select %p167, %s168, %s169
      %p173 = pneg %p167
      %p174 = scmp.eq.s32.totalorder %s22, 1
      %p175 = por %p173, %p174
      %p176 = scmp.ne.s32.totalorder %s168, %s171
      %p177 = scmp.eq.s32.totalorder %s22, 0
      %p178 = por %p176, %p177
      %p179 = scmp.ne.s32.totalorder %s168, %s171
      %p180 = scmp.eq.s32.totalorder %s27, 1
      %p181 = por %p179, %p180
      %p182 = scmp.ne.s32.totalorder %s171, %s172
      %p183 = scmp.eq.s32.totalorder %s27, 0
      %p184 = por %p182, %p183
      %p185 = scmp.ne.s32.totalorder %s171, %s172
      %p186 = scmp.eq.s32.totalorder %s28, 1
      %p187 = por %p185, %p186
      %p189 = scmp.ne.s32.totalorder %s172, %s188
      %p190 = scmp.eq.s32.totalorder %s28, 0
      %p191 = por %p189, %p190
      %p192 = scmp.le.s32.totalorder 1, %s22
      %p193 = scmp.lt.s32.totalorder %s22, 3
      %p194 = pnand %p192, %p193
      %p195 = pneg %p194
      // Predicated region
      $region9: #{tpu_custom_call.1} parent=5 // pred_check
        _
      $region10: #{tpu_custom_call.1} parent=5 // pred_check_branch
        %197 = sbr.rel (%p194) target = $region12
      $region11: #{tpu_custom_call.1} parent=5 // pred_region
        %s198 = ssub.s32 %s22, 1
        // Predicated region
        $region13: #{tpu_custom_call.1} parent=11 // pred_check
          %p199 = pneg %p95
        $region14: #{tpu_custom_call.1} parent=11 // pred_check_branch
          %201 = sbr.rel (%p199) target = $region16
        $region15: #{tpu_custom_call.1} parent=11 // pred_region
          %s203 = ssub.s32 6144, 6144
          %204 = vsyncadd [#allocation6], %s203
          %s205 = sshll.u32 [#allocation7], 4
          %s206 = int_to_ptr.vmem [resolvable:$true] %s205
          %211 = dma.hbm_to_vmem [thread:$0]  %s2, 6144, %s206, [#allocation6], 64, 64, 4
        $region16: #{tpu_custom_call.1} parent=11 // pred_fallthru
          _
        // Predicated region
        $region17: #{tpu_custom_call.1} parent=11 // pred_check
          %p212 = pneg %p116
        $region18: #{tpu_custom_call.1} parent=11 // pred_check_branch
          %214 = sbr.rel (%p212) target = $region20
        $region19: #{tpu_custom_call.1} parent=11 // pred_region
          %s216 = ssub.s32 6144, 6144
          %217 = vsyncadd [#allocation9], %s216
          %s218 = sshll.u32 [#allocation8], 4
          %s219 = int_to_ptr.vmem [resolvable:$true] %s218
          %224 = dma.hbm_to_vmem [thread:$0]  %s3, 6144, %s219, [#allocation9], 64, 64, 4
        $region20: #{tpu_custom_call.1} parent=11 // pred_fallthru
          _
        // Predicated region
        $region21: #{tpu_custom_call.1} parent=11 // pred_check
          %p225 = pneg %p137
        $region22: #{tpu_custom_call.1} parent=11 // pred_check_branch
          %227 = sbr.rel (%p225) target = $region24
        $region23: #{tpu_custom_call.1} parent=11 // pred_region
          _
        $region24: #{tpu_custom_call.1} parent=11 // pred_fallthru
          _
        // Predicated region
        $region25: #{tpu_custom_call.1} parent=11 // pred_check
          %p228 = pneg %p158
        $region26: #{tpu_custom_call.1} parent=11 // pred_check_branch
          %230 = sbr.rel (%p228) target = $region28
        $region27: #{tpu_custom_call.1} parent=11 // pred_region
          _
        $region28: #{tpu_custom_call.1} parent=11 // pred_fallthru
          _
      $region12: #{tpu_custom_call.1} parent=5 // pred_fallthru
        _
      %p231 = scmp.lt.s32.totalorder %s22, 2
      // Predicated region
      $region29: #{tpu_custom_call.1} parent=5 // pred_check
        %p232 = pneg %p231
      $region30: #{tpu_custom_call.1} parent=5 // pred_check_branch
        %234 = sbr.rel (%p232) target = $region32
      $region31: #{tpu_custom_call.1} parent=5 // pred_region
        // Predicated region
        $region33: #{tpu_custom_call.1} parent=31 // pred_check
          %p235 = pneg %p42
        $region34: #{tpu_custom_call.1} parent=31 // pred_check_branch
          %237 = sbr.rel (%p235) target = $region36
        $region35: #{tpu_custom_call.1} parent=31 // pred_region
          %s238 = sand.u32 %s32, 1
          %s239 = scalar_lea.sflag [#allocation3], %s238
          %s240 = sand.u32 %s32, 1
          %s241 = smul.addr %s240, 48
          %s242 = scalar_lea.vmem [#allocation2], %s241
          %s243 = smul.u32 2, %s22
          %s245 = ssub.s32 768, 768
          %246 = vsyncadd %s239, %s245
          %s247 = smul.addr %s243, 6
          %s248 = smul.addr %s247, 64
          %s249 = scalar_lea.hbm %s0, %s248
          %s250 = sshll.u32 %s242, 4
          %s251 = int_to_ptr.vmem [resolvable:$true] %s250
          %256 = dma.hbm_to_vmem [thread:$0]  %s249, 768, %s251, %s239, 384, 384, 24
        $region36: #{tpu_custom_call.1} parent=31 // pred_fallthru
          _
        // Predicated region
        $region37: #{tpu_custom_call.1} parent=31 // pred_check
          %p257 = pneg %p68
        $region38: #{tpu_custom_call.1} parent=31 // pred_check_branch
          %259 = sbr.rel (%p257) target = $region40
        $region39: #{tpu_custom_call.1} parent=31 // pred_region
          %s260 = sand.u32 %s22, 1
          %s261 = scalar_lea.sflag [#allocation6], %s260
          %s262 = sand.u32 %s58, 1
          %s263 = smul.addr %s262, 8
          %s264 = scalar_lea.vmem [#allocation5], %s263
          %s265 = smul.u32 2, %s22
          %s267 = ssub.s32 128, 128
          %268 = vsyncadd %s261, %s267
          %s269 = smul.addr %s265, 64
          %s270 = scalar_lea.hbm %s1, %s269
          %s271 = sshll.u32 %s264, 4
          %s272 = int_to_ptr.vmem [resolvable:$true] %s271
          %277 = dma.hbm_to_vmem [thread:$0]  %s270, 128, %s272, %s261, 64, 64, 4
        $region40: #{tpu_custom_call.1} parent=31 // pred_fallthru
          _
      $region32: #{tpu_custom_call.1} parent=5 // pred_fallthru
        _
      %p278 = scmp.le.s32.totalorder 1, %s22
      %p279 = scmp.lt.s32.totalorder %s22, 3
      %p280 = pnand %p278, %p279
      %p281 = pneg %p280
      // Predicated region
      $region41: #{tpu_custom_call.1} parent=5 // pred_check
        _
      $region42: #{tpu_custom_call.1} parent=5 // pred_check_branch
        %283 = sbr.rel (%p280) target = $region44
      $region43: #{tpu_custom_call.1} parent=5 // pred_region
        %s284 = ssub.s32 %s22, 1
        %s285 = sand.u32 %s35, 1
        %s286 = scalar_lea.sflag [#allocation3], %s285
        %s287 = sand.u32 %s35, 1
        %s288 = smul.addr %s287, 48
        %s289 = scalar_lea.vmem [#allocation2], %s288
        // Predicated region
        $region45: #{tpu_custom_call.1} parent=43 // pred_check
          %p290 = pneg %p48
        $region46: #{tpu_custom_call.1} parent=43 // pred_check_branch
          %292 = sbr.rel (%p290) target = $region48
        $region47: #{tpu_custom_call.1} parent=43 // pred_region
          %293 = dma.done %s286, 768
        $region48: #{tpu_custom_call.1} parent=43 // pred_fallthru
          _
        %s294 = sand.u32 %s27, 1
        %s295 = scalar_lea.sflag [#allocation6], %s294
        %s296 = sand.u32 %s61, 1
        %s297 = smul.addr %s296, 8
        %s298 = scalar_lea.vmem [#allocation5], %s297
        // Predicated region
        $region49: #{tpu_custom_call.1} parent=43 // pred_check
          %p299 = pneg %p74
        $region50: #{tpu_custom_call.1} parent=43 // pred_check_branch
          %301 = sbr.rel (%p299) target = $region52
        $region51: #{tpu_custom_call.1} parent=43 // pred_region
          %302 = dma.done %s295, 128
        $region52: #{tpu_custom_call.1} parent=43 // pred_fallthru
          _
        // Predicated region
        $region53: #{tpu_custom_call.1} parent=43 // pred_check
          %p303 = pneg %p95
        $region54: #{tpu_custom_call.1} parent=43 // pred_check_branch
          %305 = sbr.rel (%p303) target = $region56
        $region55: #{tpu_custom_call.1} parent=43 // pred_region
          %306 = dma.done [#allocation6], 6144
        $region56: #{tpu_custom_call.1} parent=43 // pred_fallthru
          _
        // Predicated region
        $region57: #{tpu_custom_call.1} parent=43 // pred_check
          %p307 = pneg %p116
        $region58: #{tpu_custom_call.1} parent=43 // pred_check_branch
          %309 = sbr.rel (%p307) target = $region60
        $region59: #{tpu_custom_call.1} parent=43 // pred_region
          %310 = dma.done [#allocation9], 6144
        $region60: #{tpu_custom_call.1} parent=43 // pred_fallthru
          _
        %s311 = sand.u32 %s35, 1
        %s312 = scalar_lea.sflag [#allocation3], %s311
        %s313 = sand.u32 %s35, 1
        %s314 = smul.addr %s313, 48
        %s315 = scalar_lea.vmem [#allocation2], %s314
        %p316 = pneg %p48
        %p317 = pneg %p45
        %s318 = sand.u32 %s27, 1
        %s319 = scalar_lea.sflag [#allocation6], %s318
        %s320 = sand.u32 %s61, 1
        %s321 = smul.addr %s320, 8
        %s322 = scalar_lea.vmem [#allocation5], %s321
        %p323 = pneg %p74
        %p324 = pneg %p71
        %p325 = pneg %p95
        %p326 = pneg %p92
        %p327 = pneg %p116
        %p328 = pneg %p113
        %p329 = pneg %p137
        %p330 = pneg %p134
        %p331 = pneg %p158
        %p332 = pneg %p155
        %p333 = pneg %p184
        %p334 = pneg %p181
        %s335 = sand.u32 %s171, 1
        %s336 = scalar_lea.sflag [#allocation4], %s335
        %s337 = sand.u32 %s171, 1
        %s338 = smul.addr %s337, 16
        %s339 = scalar_lea.vmem [#allocation10], %s338
        %s340 = smul.u32 2, %s27
        %s341 = smul.u32 2, %s27
        %s342 = smul.u32 2, %s27
        %v344 = vld [vmem:[%s289] sm:$0xff]
        %v345 = vld [vmem:[%s289 + $0x8] sm:$0xff]
        %v346 = vld [vmem:[%s289 + $0x10] sm:$0xff]
        %v347 = vld [vmem:[%s289 + $0x18] sm:$0xff]
        %v348 = vld [vmem:[%s289 + $0x20] sm:$0xff]
        %v349 = vld [vmem:[%s289 + $0x28] sm:$0xff]
        %v350 = vld [vmem:[#allocation7] sm:$0xf]
        %v351 = vld [vmem:[#allocation7 + $0x4] sm:$0xf]
        %v352 = vld [vmem:[#allocation7 + $0x8] sm:$0xf]
        %v353 = vld [vmem:[#allocation7 + $0xc] sm:$0xf]
        %v354 = vld [vmem:[#allocation7 + $0x10] sm:$0xf]
        %v355 = vld [vmem:[#allocation7 + $0x14] sm:$0xf]
        %v356 = vld [vmem:[#allocation7 + $0x18] sm:$0xf]
        %v357 = vld [vmem:[#allocation7 + $0x1c] sm:$0xf]
        %v358 = vld [vmem:[#allocation7 + $0x20] sm:$0xf]
        %v359 = vld [vmem:[#allocation7 + $0x24] sm:$0xf]
        %v360 = vld [vmem:[#allocation7 + $0x28] sm:$0xf]
        %v361 = vld [vmem:[#allocation7 + $0x2c] sm:$0xf]
        %v362 = vld [vmem:[#allocation7 + $0x30] sm:$0xf]
        %v363 = vld [vmem:[#allocation7 + $0x34] sm:$0xf]
        %v364 = vld [vmem:[#allocation7 + $0x38] sm:$0xf]
        %v365 = vld [vmem:[#allocation7 + $0x3c] sm:$0xf]
        %v366 = vld [vmem:[#allocation7 + $0x40] sm:$0xf]
        %v367 = vld [vmem:[#allocation7 + $0x44] sm:$0xf]
        %v368 = vld [vmem:[#allocation7 + $0x48] sm:$0xf]
        %v369 = vld [vmem:[#allocation7 + $0x4c] sm:$0xf]
        %v370 = vld [vmem:[#allocation7 + $0x50] sm:$0xf]
        %v371 = vld [vmem:[#allocation7 + $0x54] sm:$0xf]
        %v372 = vld [vmem:[#allocation7 + $0x58] sm:$0xf]
        %v373 = vld [vmem:[#allocation7 + $0x5c] sm:$0xf]
        %v374 = vld [vmem:[#allocation7 + $0x60] sm:$0xf]
        %v375 = vld [vmem:[#allocation7 + $0x64] sm:$0xf]
        %v376 = vld [vmem:[#allocation7 + $0x68] sm:$0xf]
        %v377 = vld [vmem:[#allocation7 + $0x6c] sm:$0xf]
        %v378 = vld [vmem:[#allocation7 + $0x70] sm:$0xf]
        %v379 = vld [vmem:[#allocation7 + $0x74] sm:$0xf]
        %v380 = vld [vmem:[#allocation7 + $0x78] sm:$0xf]
        %v381 = vld [vmem:[#allocation7 + $0x7c] sm:$0xf]
        %v382 = vld [vmem:[#allocation7 + $0x80] sm:$0xf]
        %v383 = vld [vmem:[#allocation7 + $0x84] sm:$0xf]
        %v384 = vld [vmem:[#allocation7 + $0x88] sm:$0xf]
        %v385 = vld [vmem:[#allocation7 + $0x8c] sm:$0xf]
        %v386 = vld [vmem:[#allocation7 + $0x90] sm:$0xf]
        %v387 = vld [vmem:[#allocation7 + $0x94] sm:$0xf]
        %v388 = vld [vmem:[#allocation7 + $0x98] sm:$0xf]
        %v389 = vld [vmem:[#allocation7 + $0x9c] sm:$0xf]
        %v390 = vld [vmem:[#allocation7 + $0xa0] sm:$0xf]
        %v391 = vld [vmem:[#allocation7 + $0xa4] sm:$0xf]
        %v392 = vld [vmem:[#allocation7 + $0xa8] sm:$0xf]
        %v393 = vld [vmem:[#allocation7 + $0xac] sm:$0xf]
        %v394 = vld [vmem:[#allocation7 + $0xb0] sm:$0xf]
        %v395 = vld [vmem:[#allocation7 + $0xb4] sm:$0xf]
        %v396 = vld [vmem:[#allocation7 + $0xb8] sm:$0xf]
        %v397 = vld [vmem:[#allocation7 + $0xbc] sm:$0xf]
        %v398 = vld [vmem:[#allocation7 + $0xc0] sm:$0xf]
        %v399 = vld [vmem:[#allocation7 + $0xc4] sm:$0xf]
        %v400 = vld [vmem:[#allocation7 + $0xc8] sm:$0xf]
        %v401 = vld [vmem:[#allocation7 + $0xcc] sm:$0xf]
        %v402 = vld [vmem:[#allocation7 + $0xd0] sm:$0xf]
        %v403 = vld [vmem:[#allocation7 + $0xd4] sm:$0xf]
        %v404 = vld [vmem:[#allocation7 + $0xd8] sm:$0xf]
        %v405 = vld [vmem:[#allocation7 + $0xdc] sm:$0xf]
        %v406 = vld [vmem:[#allocation7 + $0xe0] sm:$0xf]
        %v407 = vld [vmem:[#allocation7 + $0xe4] sm:$0xf]
        %v408 = vld [vmem:[#allocation7 + $0xe8] sm:$0xf]
        %v409 = vld [vmem:[#allocation7 + $0xec] sm:$0xf]
        %v410 = vld [vmem:[#allocation7 + $0xf0] sm:$0xf]
        %v411 = vld [vmem:[#allocation7 + $0xf4] sm:$0xf]
        %v412 = vld [vmem:[#allocation7 + $0xf8] sm:$0xf]
        %v413 = vld [vmem:[#allocation7 + $0xfc] sm:$0xf]
        %v414 = vld [vmem:[#allocation7 + $0x100] sm:$0xf]
        %v415 = vld [vmem:[#allocation7 + $0x104] sm:$0xf]
        %v416 = vld [vmem:[#allocation7 + $0x108] sm:$0xf]
        %v417 = vld [vmem:[#allocation7 + $0x10c] sm:$0xf]
        %v418 = vld [vmem:[#allocation7 + $0x110] sm:$0xf]
        %v419 = vld [vmem:[#allocation7 + $0x114] sm:$0xf]
        %v420 = vld [vmem:[#allocation7 + $0x118] sm:$0xf]
        %v421 = vld [vmem:[#allocation7 + $0x11c] sm:$0xf]
        %v422 = vld [vmem:[#allocation7 + $0x120] sm:$0xf]
        %v423 = vld [vmem:[#allocation7 + $0x124] sm:$0xf]
        %v424 = vld [vmem:[#allocation7 + $0x128] sm:$0xf]
        %v425 = vld [vmem:[#allocation7 + $0x12c] sm:$0xf]
        %v426 = vld [vmem:[#allocation7 + $0x130] sm:$0xf]
        %v427 = vld [vmem:[#allocation7 + $0x134] sm:$0xf]
        %v428 = vld [vmem:[#allocation7 + $0x138] sm:$0xf]
        %v429 = vld [vmem:[#allocation7 + $0x13c] sm:$0xf]
        %v430 = vld [vmem:[#allocation7 + $0x140] sm:$0xf]
        %v431 = vld [vmem:[#allocation7 + $0x144] sm:$0xf]
        %v432 = vld [vmem:[#allocation7 + $0x148] sm:$0xf]
        %v433 = vld [vmem:[#allocation7 + $0x14c] sm:$0xf]
        %v434 = vld [vmem:[#allocation7 + $0x150] sm:$0xf]
        %v435 = vld [vmem:[#allocation7 + $0x154] sm:$0xf]
        %v436 = vld [vmem:[#allocation7 + $0x158] sm:$0xf]
        %v437 = vld [vmem:[#allocation7 + $0x15c] sm:$0xf]
        %v438 = vld [vmem:[#allocation7 + $0x160] sm:$0xf]
        %v439 = vld [vmem:[#allocation7 + $0x164] sm:$0xf]
        %v440 = vld [vmem:[#allocation7 + $0x168] sm:$0xf]
        %v441 = vld [vmem:[#allocation7 + $0x16c] sm:$0xf]
        %v442 = vld [vmem:[#allocation7 + $0x170] sm:$0xf]
        %v443 = vld [vmem:[#allocation7 + $0x174] sm:$0xf]
        %v444 = vld [vmem:[#allocation7 + $0x178] sm:$0xf]
        %v445 = vld [vmem:[#allocation7 + $0x17c] sm:$0xf]
        %v446 = vld [vmem:[%s4] sm:$0x1]
        %v448 = vlaneseq
        %v449 = vshrl.u32 %v448, 7
        %v450 = vsub.s32 0, %v449
        %v451 = vrot.slane %v446, %v450
        %v459 = vunpack.c.l.b16 %v344
        %v460 = vunpack.c.h.b16 %v344
        %v461 = vunpack.c.l.b16 %v345
        %v462 = vunpack.c.h.b16 %v345
        %v463 = vunpack.c.l.b16 %v346
        %v464 = vunpack.c.h.b16 %v346
        %v465 = vunpack.c.l.b16 %v347
        %v466 = vunpack.c.h.b16 %v347
        %v467 = vunpack.c.l.b16 %v348
        %v468 = vunpack.c.h.b16 %v348
        %v469 = vunpack.c.l.b16 %v349
        %v470 = vunpack.c.h.b16 %v349
        %v471 = vpack.c.b16 %v465, %v459
        %v472 = vpack.c.b16 %v466, %v460
        %v473 = vpack.c.b16 %v467, %v461
        %v474 = vpack.c.b16 %v468, %v462
        %v475 = vpack.c.b16 %v469, %v463
        %v476 = vpack.c.b16 %v470, %v464
        %v579 = vunpack.c.l.b16 %v350
        %v580 = vunpack.c.l.b16 %v351
        %v581 = vunpack.c.l.b16 %v352
        %v582 = vunpack.c.l.b16 %v353
        %v583 = vunpack.c.l.b16 %v354
        %v584 = vunpack.c.l.b16 %v355
        %v585 = vunpack.c.l.b16 %v356
        %v586 = vunpack.c.l.b16 %v357
        %v587 = vunpack.c.l.b16 %v358
        %v588 = vunpack.c.l.b16 %v359
        %v589 = vunpack.c.l.b16 %v360
        %v590 = vunpack.c.l.b16 %v361
        %v591 = vunpack.c.l.b16 %v362
        %v592 = vunpack.c.l.b16 %v363
        %v593 = vunpack.c.l.b16 %v364
        %v594 = vunpack.c.l.b16 %v365
        %v595 = vunpack.c.l.b16 %v366
        %v596 = vunpack.c.l.b16 %v367
        %v597 = vunpack.c.l.b16 %v368
        %v598 = vunpack.c.l.b16 %v369
        %v599 = vunpack.c.l.b16 %v370
        %v600 = vunpack.c.l.b16 %v371
        %v601 = vunpack.c.l.b16 %v372
        %v602 = vunpack.c.l.b16 %v373
        %v603 = vunpack.c.l.b16 %v374
        %v604 = vunpack.c.l.b16 %v375
        %v605 = vunpack.c.l.b16 %v376
        %v606 = vunpack.c.l.b16 %v377
        %v607 = vunpack.c.l.b16 %v378
        %v608 = vunpack.c.l.b16 %v379
        %v609 = vunpack.c.l.b16 %v380
        %v610 = vunpack.c.l.b16 %v381
        %v611 = vunpack.c.l.b16 %v382
        %v612 = vunpack.c.l.b16 %v383
        %v613 = vunpack.c.l.b16 %v384
        %v614 = vunpack.c.l.b16 %v385
        %v615 = vunpack.c.l.b16 %v386
        %v616 = vunpack.c.l.b16 %v387
        %v617 = vunpack.c.l.b16 %v388
        %v618 = vunpack.c.l.b16 %v389
        %v619 = vunpack.c.l.b16 %v390
        %v620 = vunpack.c.l.b16 %v391
        %v621 = vunpack.c.l.b16 %v392
        %v622 = vunpack.c.l.b16 %v393
        %v623 = vunpack.c.l.b16 %v394
        %v624 = vunpack.c.l.b16 %v395
        %v625 = vunpack.c.l.b16 %v396
        %v626 = vunpack.c.l.b16 %v397
        %v627 = vunpack.c.l.b16 %v398
        %v628 = vunpack.c.l.b16 %v399
        %v629 = vunpack.c.l.b16 %v400
        %v630 = vunpack.c.l.b16 %v401
        %v631 = vunpack.c.l.b16 %v402
        %v632 = vunpack.c.l.b16 %v403
        %v633 = vunpack.c.l.b16 %v404
        %v634 = vunpack.c.l.b16 %v405
        %v635 = vunpack.c.l.b16 %v406
        %v636 = vunpack.c.l.b16 %v407
        %v637 = vunpack.c.l.b16 %v408
        %v638 = vunpack.c.l.b16 %v409
        %v639 = vunpack.c.l.b16 %v410
        %v640 = vunpack.c.l.b16 %v411
        %v641 = vunpack.c.l.b16 %v412
        %v642 = vunpack.c.l.b16 %v413
        %v643 = vunpack.c.l.b16 %v414
        %v644 = vunpack.c.l.b16 %v415
        %v645 = vunpack.c.l.b16 %v416
        %v646 = vunpack.c.l.b16 %v417
        %v647 = vunpack.c.l.b16 %v418
        %v648 = vunpack.c.l.b16 %v419
        %v649 = vunpack.c.l.b16 %v420
        %v650 = vunpack.c.l.b16 %v421
        %v651 = vunpack.c.l.b16 %v422
        %v652 = vunpack.c.l.b16 %v423
        %v653 = vunpack.c.l.b16 %v424
        %v654 = vunpack.c.l.b16 %v425
        %v655 = vunpack.c.l.b16 %v426
        %v656 = vunpack.c.l.b16 %v427
        %v657 = vunpack.c.l.b16 %v428
        %v658 = vunpack.c.l.b16 %v429
        %v659 = vunpack.c.l.b16 %v430
        %v660 = vunpack.c.l.b16 %v431
        %v661 = vunpack.c.l.b16 %v432
        %v662 = vunpack.c.l.b16 %v433
        %v663 = vunpack.c.l.b16 %v434
        %v664 = vunpack.c.l.b16 %v435
        %v665 = vunpack.c.l.b16 %v436
        %v666 = vunpack.c.l.b16 %v437
        %v667 = vunpack.c.l.b16 %v438
        %v668 = vunpack.c.l.b16 %v439
        %v669 = vunpack.c.l.b16 %v440
        %v670 = vunpack.c.l.b16 %v441
        %v671 = vunpack.c.l.b16 %v442
        %v672 = vunpack.c.l.b16 %v443
        %v673 = vunpack.c.l.b16 %v444
        %v674 = vunpack.c.l.b16 %v445
        %v675 = vpack.c.b16 %v580, %v579
        %v676 = vpack.c.b16 %v582, %v581
        %v677 = vpack.c.b16 %v584, %v583
        %v678 = vpack.c.b16 %v586, %v585
        %v679 = vpack.c.b16 %v588, %v587
        %v680 = vpack.c.b16 %v590, %v589
        %v681 = vpack.c.b16 %v592, %v591
        %v682 = vpack.c.b16 %v594, %v593
        %v683 = vpack.c.b16 %v596, %v595
        %v684 = vpack.c.b16 %v598, %v597
        %v685 = vpack.c.b16 %v600, %v599
        %v686 = vpack.c.b16 %v602, %v601
        %v687 = vpack.c.b16 %v604, %v603
        %v688 = vpack.c.b16 %v606, %v605
        %v689 = vpack.c.b16 %v608, %v607
        %v690 = vpack.c.b16 %v610, %v609
        %v691 = vpack.c.b16 %v612, %v611
        %v692 = vpack.c.b16 %v614, %v613
        %v693 = vpack.c.b16 %v616, %v615
        %v694 = vpack.c.b16 %v618, %v617
        %v695 = vpack.c.b16 %v620, %v619
        %v696 = vpack.c.b16 %v622, %v621
        %v697 = vpack.c.b16 %v624, %v623
        %v698 = vpack.c.b16 %v626, %v625
        %v699 = vpack.c.b16 %v628, %v627
        %v700 = vpack.c.b16 %v630, %v629
        %v701 = vpack.c.b16 %v632, %v631
        %v702 = vpack.c.b16 %v634, %v633
        %v703 = vpack.c.b16 %v636, %v635
        %v704 = vpack.c.b16 %v638, %v637
        %v705 = vpack.c.b16 %v640, %v639
        %v706 = vpack.c.b16 %v642, %v641
        %v707 = vpack.c.b16 %v644, %v643
        %v708 = vpack.c.b16 %v646, %v645
        %v709 = vpack.c.b16 %v648, %v647
        %v710 = vpack.c.b16 %v650, %v649
        %v711 = vpack.c.b16 %v652, %v651
        %v712 = vpack.c.b16 %v654, %v653
        %v713 = vpack.c.b16 %v656, %v655
        %v714 = vpack.c.b16 %v658, %v657
        %v715 = vpack.c.b16 %v660, %v659
        %v716 = vpack.c.b16 %v662, %v661
        %v717 = vpack.c.b16 %v664, %v663
        %v718 = vpack.c.b16 %v666, %v665
        %v719 = vpack.c.b16 %v668, %v667
        %v720 = vpack.c.b16 %v670, %v669
        %v721 = vpack.c.b16 %v672, %v671
        %v722 = vpack.c.b16 %v674, %v673
        %771 = vmatprep.subr.bf16.mxu0 0
        %772 = vmatpush1.bf16.msra.mxu0 %v675
        %773 = vmatprep.subr.bf16.mxu0 0
        %774 = vmatpush1.bf16.msra.mxu0 %v676
        %775 = vmatprep.subr.bf16.mxu0 0
        %776 = vmatpush1.bf16.msra.mxu0 %v677
        %777 = vmatprep.subr.bf16.mxu0 0
        %778 = vmatpush1.bf16.msra.mxu0 %v678
        %779 = vmatprep.subr.bf16.mxu0 0
        %780 = vmatpush1.bf16.msra.mxu0 %v679
        %781 = vmatprep.subr.bf16.mxu0 0
        %782 = vmatpush1.bf16.msra.mxu0 %v680
        %783 = vmatprep.subr.bf16.mxu0 0
        %784 = vmatpush1.bf16.msra.mxu0 %v681
        %785 = vmatprep.subr.bf16.mxu0 0
        %786 = vmatpush1.bf16.msra.mxu0 %v682
        %787 = vmatprep.subr.bf16.mxu0 0
        %788 = vmatpush1.bf16.msra.mxu0 %v683
        %789 = vmatprep.subr.bf16.mxu0 0
        %790 = vmatpush1.bf16.msra.mxu0 %v684
        %791 = vmatprep.subr.bf16.mxu0 0
        %792 = vmatpush1.bf16.msra.mxu0 %v685
        %793 = vmatprep.subr.bf16.mxu0 0
        %794 = vmatpush1.bf16.msra.mxu0 %v686
        %795 = vmatprep.subr.bf16.mxu0 0
        %796 = vmatpush1.bf16.msra.mxu0 %v687
        %797 = vmatprep.subr.bf16.mxu0 0
        %798 = vmatpush1.bf16.msra.mxu0 %v688
        %799 = vmatprep.subr.bf16.mxu0 0
        %800 = vmatpush1.bf16.msra.mxu0 %v689
        %801 = vmatprep.subr.bf16.mxu0 0
        %802 = vmatpush1.bf16.msra.mxu0 %v690
        %803 = vmatprep.mubr.bf16.mxu0 %v472
        %804 = vmatmul.mubr.bf16.gmra.mrb[0].mxu0 %v471
        %v805 = vpop.f32.mrb[0].mxu0
        %v806 = vadd.f32 %v451, %v805
        %v807 = vpop.f32.mrb[0].mxu0
        %v808 = vpop.f32.mrb[0].mxu0
        %v809 = vadd.f32 %v451, %v808
        %v810 = vpop.f32.mrb[0].mxu0
        %811 = vdwg.mxu0
        %812 = vmatprep.subr.bf16.mxu0 0
        %813 = vmatpush1.bf16.msra.mxu0 %v691
        %814 = vmatprep.subr.bf16.mxu0 0
        %815 = vmatpush1.bf16.msra.mxu0 %v692
        %816 = vmatprep.subr.bf16.mxu0 0
        %817 = vmatpush1.bf16.msra.mxu0 %v693
        %818 = vmatprep.subr.bf16.mxu0 0
        %819 = vmatpush1.bf16.msra.mxu0 %v694
        %820 = vmatprep.subr.bf16.mxu0 0
        %821 = vmatpush1.bf16.msra.mxu0 %v695
        %822 = vmatprep.subr.bf16.mxu0 0
        %823 = vmatpush1.bf16.msra.mxu0 %v696
        %824 = vmatprep.subr.bf16.mxu0 0
        %825 = vmatpush1.bf16.msra.mxu0 %v697
        %826 = vmatprep.subr.bf16.mxu0 0
        %827 = vmatpush1.bf16.msra.mxu0 %v698
        %828 = vmatprep.subr.bf16.mxu0 0
        %829 = vmatpush1.bf16.msra.mxu0 %v699
        %830 = vmatprep.subr.bf16.mxu0 0
        %831 = vmatpush1.bf16.msra.mxu0 %v700
        %832 = vmatprep.subr.bf16.mxu0 0
        %833 = vmatpush1.bf16.msra.mxu0 %v701
        %834 = vmatprep.subr.bf16.mxu0 0
        %835 = vmatpush1.bf16.msra.mxu0 %v702
        %836 = vmatprep.subr.bf16.mxu0 0
        %837 = vmatpush1.bf16.msra.mxu0 %v703
        %838 = vmatprep.subr.bf16.mxu0 0
        %839 = vmatpush1.bf16.msra.mxu0 %v704
        %840 = vmatprep.subr.bf16.mxu0 0
        %841 = vmatpush1.bf16.msra.mxu0 %v705
        %842 = vmatprep.subr.bf16.mxu0 0
        %843 = vmatpush1.bf16.msra.mxu0 %v706
        %844 = vmatprep.mubr.bf16.mxu0 %v474
        %845 = vmatmul.mubr.bf16.gmra.mrb[0].mxu0 %v473
        %v846 = vpop.f32.mrb[0].mxu0
        %v847 = vadd.f32 %v806, %v846
        %v848 = vpop.f32.mrb[0].mxu0
        %v849 = vpop.f32.mrb[0].mxu0
        %v850 = vadd.f32 %v809, %v849
        %v851 = vpop.f32.mrb[0].mxu0
        %852 = vdwg.mxu0
        %853 = vmatprep.subr.bf16.mxu0 0
        %854 = vmatpush1.bf16.msra.mxu0 %v707
        %855 = vmatprep.subr.bf16.mxu0 0
        %856 = vmatpush1.bf16.msra.mxu0 %v708
        %857 = vmatprep.subr.bf16.mxu0 0
        %858 = vmatpush1.bf16.msra.mxu0 %v709
        %859 = vmatprep.subr.bf16.mxu0 0
        %860 = vmatpush1.bf16.msra.mxu0 %v710
        %861 = vmatprep.subr.bf16.mxu0 0
        %862 = vmatpush1.bf16.msra.mxu0 %v711
        %863 = vmatprep.subr.bf16.mxu0 0
        %864 = vmatpush1.bf16.msra.mxu0 %v712
        %865 = vmatprep.subr.bf16.mxu0 0
        %866 = vmatpush1.bf16.msra.mxu0 %v713
        %867 = vmatprep.subr.bf16.mxu0 0
        %868 = vmatpush1.bf16.msra.mxu0 %v714
        %869 = vmatprep.subr.bf16.mxu0 0
        %870 = vmatpush1.bf16.msra.mxu0 %v715
        %871 = vmatprep.subr.bf16.mxu0 0
        %872 = vmatpush1.bf16.msra.mxu0 %v716
        %873 = vmatprep.subr.bf16.mxu0 0
        %874 = vmatpush1.bf16.msra.mxu0 %v717
        %875 = vmatprep.subr.bf16.mxu0 0
        %876 = vmatpush1.bf16.msra.mxu0 %v718
        %877 = vmatprep.subr.bf16.mxu0 0
        %878 = vmatpush1.bf16.msra.mxu0 %v719
        %879 = vmatprep.subr.bf16.mxu0 0
        %880 = vmatpush1.bf16.msra.mxu0 %v720
        %881 = vmatprep.subr.bf16.mxu0 0
        %882 = vmatpush1.bf16.msra.mxu0 %v721
        %883 = vmatprep.subr.bf16.mxu0 0
        %884 = vmatpush1.bf16.msra.mxu0 %v722
        %885 = vmatprep.mubr.bf16.mxu0 %v476
        %886 = vmatmul.mubr.bf16.gmra.mrb[0].mxu0 %v475
        %v887 = vpop.f32.mrb[0].mxu0
        %v888 = vadd.f32 %v847, %v887
        %v889 = vpop.f32.mrb[0].mxu0
        %v890 = vpop.f32.mrb[0].mxu0
        %v891 = vadd.f32 %v850, %v890
        %v892 = vpop.f32.mrb[0].mxu0
        %893 = vdwg.mxu0
        %v894 = vmul.bf16 %v344, %v344
        %v895 = vmul.bf16 %v345, %v345
        %v896 = vmul.bf16 %v346, %v346
        %v897 = vmul.bf16 %v347, %v347
        %v898 = vmul.bf16 %v348, %v348
        %v899 = vmul.bf16 %v349, %v349
        %v900 = vld [vmem:[#allocation8] sm:$0xf]
        %v901 = vld [vmem:[#allocation8 + $0x4] sm:$0xf]
        %v902 = vld [vmem:[#allocation8 + $0x8] sm:$0xf]
        %v903 = vld [vmem:[#allocation8 + $0xc] sm:$0xf]
        %v904 = vld [vmem:[#allocation8 + $0x10] sm:$0xf]
        %v905 = vld [vmem:[#allocation8 + $0x14] sm:$0xf]
        %v906 = vld [vmem:[#allocation8 + $0x18] sm:$0xf]
        %v907 = vld [vmem:[#allocation8 + $0x1c] sm:$0xf]
        %v908 = vld [vmem:[#allocation8 + $0x20] sm:$0xf]
        %v909 = vld [vmem:[#allocation8 + $0x24] sm:$0xf]
        %v910 = vld [vmem:[#allocation8 + $0x28] sm:$0xf]
        %v911 = vld [vmem:[#allocation8 + $0x2c] sm:$0xf]
        %v912 = vld [vmem:[#allocation8 + $0x30] sm:$0xf]
        %v913 = vld [vmem:[#allocation8 + $0x34] sm:$0xf]
        %v914 = vld [vmem:[#allocation8 + $0x38] sm:$0xf]
        %v915 = vld [vmem:[#allocation8 + $0x3c] sm:$0xf]
        %v916 = vld [vmem:[#allocation8 + $0x40] sm:$0xf]
        %v917 = vld [vmem:[#allocation8 + $0x44] sm:$0xf]
        %v918 = vld [vmem:[#allocation8 + $0x48] sm:$0xf]
        %v919 = vld [vmem:[#allocation8 + $0x4c] sm:$0xf]
        %v920 = vld [vmem:[#allocation8 + $0x50] sm:$0xf]
        %v921 = vld [vmem:[#allocation8 + $0x54] sm:$0xf]
        %v922 = vld [vmem:[#allocation8 + $0x58] sm:$0xf]
        %v923 = vld [vmem:[#allocation8 + $0x5c] sm:$0xf]
        %v924 = vld [vmem:[#allocation8 + $0x60] sm:$0xf]
        %v925 = vld [vmem:[#allocation8 + $0x64] sm:$0xf]
        %v926 = vld [vmem:[#allocation8 + $0x68] sm:$0xf]
        %v927 = vld [vmem:[#allocation8 + $0x6c] sm:$0xf]
        %v928 = vld [vmem:[#allocation8 + $0x70] sm:$0xf]
        %v929 = vld [vmem:[#allocation8 + $0x74] sm:$0xf]
        %v930 = vld [vmem:[#allocation8 + $0x78] sm:$0xf]
        %v931 = vld [vmem:[#allocation8 + $0x7c] sm:$0xf]
        %v932 = vld [vmem:[#allocation8 + $0x80] sm:$0xf]
        %v933 = vld [vmem:[#allocation8 + $0x84] sm:$0xf]
        %v934 = vld [vmem:[#allocation8 + $0x88] sm:$0xf]
        %v935 = vld [vmem:[#allocation8 + $0x8c] sm:$0xf]
        %v936 = vld [vmem:[#allocation8 + $0x90] sm:$0xf]
        %v937 = vld [vmem:[#allocation8 + $0x94] sm:$0xf]
        %v938 = vld [vmem:[#allocation8 + $0x98] sm:$0xf]
        %v939 = vld [vmem:[#allocation8 + $0x9c] sm:$0xf]
        %v940 = vld [vmem:[#allocation8 + $0xa0] sm:$0xf]
        %v941 = vld [vmem:[#allocation8 + $0xa4] sm:$0xf]
        %v942 = vld [vmem:[#allocation8 + $0xa8] sm:$0xf]
        %v943 = vld [vmem:[#allocation8 + $0xac] sm:$0xf]
        %v944 = vld [vmem:[#allocation8 + $0xb0] sm:$0xf]
        %v945 = vld [vmem:[#allocation8 + $0xb4] sm:$0xf]
        %v946 = vld [vmem:[#allocation8 + $0xb8] sm:$0xf]
        %v947 = vld [vmem:[#allocation8 + $0xbc] sm:$0xf]
        %v948 = vld [vmem:[#allocation8 + $0xc0] sm:$0xf]
        %v949 = vld [vmem:[#allocation8 + $0xc4] sm:$0xf]
        %v950 = vld [vmem:[#allocation8 + $0xc8] sm:$0xf]
        %v951 = vld [vmem:[#allocation8 + $0xcc] sm:$0xf]
        %v952 = vld [vmem:[#allocation8 + $0xd0] sm:$0xf]
        %v953 = vld [vmem:[#allocation8 + $0xd4] sm:$0xf]
        %v954 = vld [vmem:[#allocation8 + $0xd8] sm:$0xf]
        %v955 = vld [vmem:[#allocation8 + $0xdc] sm:$0xf]
        %v956 = vld [vmem:[#allocation8 + $0xe0] sm:$0xf]
        %v957 = vld [vmem:[#allocation8 + $0xe4] sm:$0xf]
        %v958 = vld [vmem:[#allocation8 + $0xe8] sm:$0xf]
        %v959 = vld [vmem:[#allocation8 + $0xec] sm:$0xf]
        %v960 = vld [vmem:[#allocation8 + $0xf0] sm:$0xf]
        %v961 = vld [vmem:[#allocation8 + $0xf4] sm:$0xf]
        %v962 = vld [vmem:[#allocation8 + $0xf8] sm:$0xf]
        %v963 = vld [vmem:[#allocation8 + $0xfc] sm:$0xf]
        %v964 = vld [vmem:[#allocation8 + $0x100] sm:$0xf]
        %v965 = vld [vmem:[#allocation8 + $0x104] sm:$0xf]
        %v966 = vld [vmem:[#allocation8 + $0x108] sm:$0xf]
        %v967 = vld [vmem:[#allocation8 + $0x10c] sm:$0xf]
        %v968 = vld [vmem:[#allocation8 + $0x110] sm:$0xf]
        %v969 = vld [vmem:[#allocation8 + $0x114] sm:$0xf]
        %v970 = vld [vmem:[#allocation8 + $0x118] sm:$0xf]
        %v971 = vld [vmem:[#allocation8 + $0x11c] sm:$0xf]
        %v972 = vld [vmem:[#allocation8 + $0x120] sm:$0xf]
        %v973 = vld [vmem:[#allocation8 + $0x124] sm:$0xf]
        %v974 = vld [vmem:[#allocation8 + $0x128] sm:$0xf]
        %v975 = vld [vmem:[#allocation8 + $0x12c] sm:$0xf]
        %v976 = vld [vmem:[#allocation8 + $0x130] sm:$0xf]
        %v977 = vld [vmem:[#allocation8 + $0x134] sm:$0xf]
        %v978 = vld [vmem:[#allocation8 + $0x138] sm:$0xf]
        %v979 = vld [vmem:[#allocation8 + $0x13c] sm:$0xf]
        %v980 = vld [vmem:[#allocation8 + $0x140] sm:$0xf]
        %v981 = vld [vmem:[#allocation8 + $0x144] sm:$0xf]
        %v982 = vld [vmem:[#allocation8 + $0x148] sm:$0xf]
        %v983 = vld [vmem:[#allocation8 + $0x14c] sm:$0xf]
        %v984 = vld [vmem:[#allocation8 + $0x150] sm:$0xf]
        %v985 = vld [vmem:[#allocation8 + $0x154] sm:$0xf]
        %v986 = vld [vmem:[#allocation8 + $0x158] sm:$0xf]
        %v987 = vld [vmem:[#allocation8 + $0x15c] sm:$0xf]
        %v988 = vld [vmem:[#allocation8 + $0x160] sm:$0xf]
        %v989 = vld [vmem:[#allocation8 + $0x164] sm:$0xf]
        %v990 = vld [vmem:[#allocation8 + $0x168] sm:$0xf]
        %v991 = vld [vmem:[#allocation8 + $0x16c] sm:$0xf]
        %v992 = vld [vmem:[#allocation8 + $0x170] sm:$0xf]
        %v993 = vld [vmem:[#allocation8 + $0x174] sm:$0xf]
        %v994 = vld [vmem:[#allocation8 + $0x178] sm:$0xf]
        %v995 = vld [vmem:[#allocation8 + $0x17c] sm:$0xf]
        %v996 = vld [vmem:[%s5] sm:$0x1]
        %v998 = vlaneseq
        %v999 = vshrl.u32 %v998, 7
        %v1000 = vsub.s32 0, %v999
        %v1001 = vrot.slane %v996, %v1000
        %v1009 = vunpack.c.l.b16 %v894
        %v1010 = vunpack.c.h.b16 %v894
        %v1011 = vunpack.c.l.b16 %v895
        %v1012 = vunpack.c.h.b16 %v895
        %v1013 = vunpack.c.l.b16 %v896
        %v1014 = vunpack.c.h.b16 %v896
        %v1015 = vunpack.c.l.b16 %v897
        %v1016 = vunpack.c.h.b16 %v897
        %v1017 = vunpack.c.l.b16 %v898
        %v1018 = vunpack.c.h.b16 %v898
        %v1019 = vunpack.c.l.b16 %v899
        %v1020 = vunpack.c.h.b16 %v899
        %v1021 = vpack.c.b16 %v1015, %v1009
        %v1022 = vpack.c.b16 %v1016, %v1010
        %v1023 = vpack.c.b16 %v1017, %v1011
        %v1024 = vpack.c.b16 %v1018, %v1012
        %v1025 = vpack.c.b16 %v1019, %v1013
        %v1026 = vpack.c.b16 %v1020, %v1014
        %v1129 = vunpack.c.l.b16 %v900
        %v1130 = vunpack.c.l.b16 %v901
        %v1131 = vunpack.c.l.b16 %v902
        %v1132 = vunpack.c.l.b16 %v903
        %v1133 = vunpack.c.l.b16 %v904
        %v1134 = vunpack.c.l.b16 %v905
        %v1135 = vunpack.c.l.b16 %v906
        %v1136 = vunpack.c.l.b16 %v907
        %v1137 = vunpack.c.l.b16 %v908
        %v1138 = vunpack.c.l.b16 %v909
        %v1139 = vunpack.c.l.b16 %v910
        %v1140 = vunpack.c.l.b16 %v911
        %v1141 = vunpack.c.l.b16 %v912
        %v1142 = vunpack.c.l.b16 %v913
        %v1143 = vunpack.c.l.b16 %v914
        %v1144 = vunpack.c.l.b16 %v915
        %v1145 = vunpack.c.l.b16 %v916
        %v1146 = vunpack.c.l.b16 %v917
        %v1147 = vunpack.c.l.b16 %v918
        %v1148 = vunpack.c.l.b16 %v919
        %v1149 = vunpack.c.l.b16 %v920
        %v1150 = vunpack.c.l.b16 %v921
        %v1151 = vunpack.c.l.b16 %v922
        %v1152 = vunpack.c.l.b16 %v923
        %v1153 = vunpack.c.l.b16 %v924
        %v1154 = vunpack.c.l.b16 %v925
        %v1155 = vunpack.c.l.b16 %v926
        %v1156 = vunpack.c.l.b16 %v927
        %v1157 = vunpack.c.l.b16 %v928
        %v1158 = vunpack.c.l.b16 %v929
        %v1159 = vunpack.c.l.b16 %v930
        %v1160 = vunpack.c.l.b16 %v931
        %v1161 = vunpack.c.l.b16 %v932
        %v1162 = vunpack.c.l.b16 %v933
        %v1163 = vunpack.c.l.b16 %v934
        %v1164 = vunpack.c.l.b16 %v935
        %v1165 = vunpack.c.l.b16 %v936
        %v1166 = vunpack.c.l.b16 %v937
        %v1167 = vunpack.c.l.b16 %v938
        %v1168 = vunpack.c.l.b16 %v939
        %v1169 = vunpack.c.l.b16 %v940
        %v1170 = vunpack.c.l.b16 %v941
        %v1171 = vunpack.c.l.b16 %v942
        %v1172 = vunpack.c.l.b16 %v943
        %v1173 = vunpack.c.l.b16 %v944
        %v1174 = vunpack.c.l.b16 %v945
        %v1175 = vunpack.c.l.b16 %v946
        %v1176 = vunpack.c.l.b16 %v947
        %v1177 = vunpack.c.l.b16 %v948
        %v1178 = vunpack.c.l.b16 %v949
        %v1179 = vunpack.c.l.b16 %v950
        %v1180 = vunpack.c.l.b16 %v951
        %v1181 = vunpack.c.l.b16 %v952
        %v1182 = vunpack.c.l.b16 %v953
        %v1183 = vunpack.c.l.b16 %v954
        %v1184 = vunpack.c.l.b16 %v955
        %v1185 = vunpack.c.l.b16 %v956
        %v1186 = vunpack.c.l.b16 %v957
        %v1187 = vunpack.c.l.b16 %v958
        %v1188 = vunpack.c.l.b16 %v959
        %v1189 = vunpack.c.l.b16 %v960
        %v1190 = vunpack.c.l.b16 %v961
        %v1191 = vunpack.c.l.b16 %v962
        %v1192 = vunpack.c.l.b16 %v963
        %v1193 = vunpack.c.l.b16 %v964
        %v1194 = vunpack.c.l.b16 %v965
        %v1195 = vunpack.c.l.b16 %v966
        %v1196 = vunpack.c.l.b16 %v967
        %v1197 = vunpack.c.l.b16 %v968
        %v1198 = vunpack.c.l.b16 %v969
        %v1199 = vunpack.c.l.b16 %v970
        %v1200 = vunpack.c.l.b16 %v971
        %v1201 = vunpack.c.l.b16 %v972
        %v1202 = vunpack.c.l.b16 %v973
        %v1203 = vunpack.c.l.b16 %v974
        %v1204 = vunpack.c.l.b16 %v975
        %v1205 = vunpack.c.l.b16 %v976
        %v1206 = vunpack.c.l.b16 %v977
        %v1207 = vunpack.c.l.b16 %v978
        %v1208 = vunpack.c.l.b16 %v979
        %v1209 = vunpack.c.l.b16 %v980
        %v1210 = vunpack.c.l.b16 %v981
        %v1211 = vunpack.c.l.b16 %v982
        %v1212 = vunpack.c.l.b16 %v983
        %v1213 = vunpack.c.l.b16 %v984
        %v1214 = vunpack.c.l.b16 %v985
        %v1215 = vunpack.c.l.b16 %v986
        %v1216 = vunpack.c.l.b16 %v987
        %v1217 = vunpack.c.l.b16 %v988
        %v1218 = vunpack.c.l.b16 %v989
        %v1219 = vunpack.c.l.b16 %v990
        %v1220 = vunpack.c.l.b16 %v991
        %v1221 = vunpack.c.l.b16 %v992
        %v1222 = vunpack.c.l.b16 %v993
        %v1223 = vunpack.c.l.b16 %v994
        %v1224 = vunpack.c.l.b16 %v995
        %v1225 = vpack.c.b16 %v1130, %v1129
        %v1226 = vpack.c.b16 %v1132, %v1131
        %v1227 = vpack.c.b16 %v1134, %v1133
        %v1228 = vpack.c.b16 %v1136, %v1135
        %v1229 = vpack.c.b16 %v1138, %v1137
        %v1230 = vpack.c.b16 %v1140, %v1139
        %v1231 = vpack.c.b16 %v1142, %v1141
        %v1232 = vpack.c.b16 %v1144, %v1143
        %v1233 = vpack.c.b16 %v1146, %v1145
        %v1234 = vpack.c.b16 %v1148, %v1147
        %v1235 = vpack.c.b16 %v1150, %v1149
        %v1236 = vpack.c.b16 %v1152, %v1151
        %v1237 = vpack.c.b16 %v1154, %v1153
        %v1238 = vpack.c.b16 %v1156, %v1155
        %v1239 = vpack.c.b16 %v1158, %v1157
        %v1240 = vpack.c.b16 %v1160, %v1159
        %v1241 = vpack.c.b16 %v1162, %v1161
        %v1242 = vpack.c.b16 %v1164, %v1163
        %v1243 = vpack.c.b16 %v1166, %v1165
        %v1244 = vpack.c.b16 %v1168, %v1167
        %v1245 = vpack.c.b16 %v1170, %v1169
        %v1246 = vpack.c.b16 %v1172, %v1171
        %v1247 = vpack.c.b16 %v1174, %v1173
        %v1248 = vpack.c.b16 %v1176, %v1175
        %v1249 = vpack.c.b16 %v1178, %v1177
        %v1250 = vpack.c.b16 %v1180, %v1179
        %v1251 = vpack.c.b16 %v1182, %v1181
        %v1252 = vpack.c.b16 %v1184, %v1183
        %v1253 = vpack.c.b16 %v1186, %v1185
        %v1254 = vpack.c.b16 %v1188, %v1187
        %v1255 = vpack.c.b16 %v1190, %v1189
        %v1256 = vpack.c.b16 %v1192, %v1191
        %v1257 = vpack.c.b16 %v1194, %v1193
        %v1258 = vpack.c.b16 %v1196, %v1195
        %v1259 = vpack.c.b16 %v1198, %v1197
        %v1260 = vpack.c.b16 %v1200, %v1199
        %v1261 = vpack.c.b16 %v1202, %v1201
        %v1262 = vpack.c.b16 %v1204, %v1203
        %v1263 = vpack.c.b16 %v1206, %v1205
        %v1264 = vpack.c.b16 %v1208, %v1207
        %v1265 = vpack.c.b16 %v1210, %v1209
        %v1266 = vpack.c.b16 %v1212, %v1211
        %v1267 = vpack.c.b16 %v1214, %v1213
        %v1268 = vpack.c.b16 %v1216, %v1215
        %v1269 = vpack.c.b16 %v1218, %v1217
        %v1270 = vpack.c.b16 %v1220, %v1219
        %v1271 = vpack.c.b16 %v1222, %v1221
        %v1272 = vpack.c.b16 %v1224, %v1223
        %1321 = vmatprep.subr.bf16.mxu0 0
        %1322 = vmatpush1.bf16.msra.mxu0 %v1225
        %1323 = vmatprep.subr.bf16.mxu0 0
        %1324 = vmatpush1.bf16.msra.mxu0 %v1226
        %1325 = vmatprep.subr.bf16.mxu0 0
        %1326 = vmatpush1.bf16.msra.mxu0 %v1227
        %1327 = vmatprep.subr.bf16.mxu0 0
        %1328 = vmatpush1.bf16.msra.mxu0 %v1228
        %1329 = vmatprep.subr.bf16.mxu0 0
        %1330 = vmatpush1.bf16.msra.mxu0 %v1229
        %1331 = vmatprep.subr.bf16.mxu0 0
        %1332 = vmatpush1.bf16.msra.mxu0 %v1230
        %1333 = vmatprep.subr.bf16.mxu0 0
        %1334 = vmatpush1.bf16.msra.mxu0 %v1231
        %1335 = vmatprep.subr.bf16.mxu0 0
        %1336 = vmatpush1.bf16.msra.mxu0 %v1232
        %1337 = vmatprep.subr.bf16.mxu0 0
        %1338 = vmatpush1.bf16.msra.mxu0 %v1233
        %1339 = vmatprep.subr.bf16.mxu0 0
        %1340 = vmatpush1.bf16.msra.mxu0 %v1234
        %1341 = vmatprep.subr.bf16.mxu0 0
        %1342 = vmatpush1.bf16.msra.mxu0 %v1235
        %1343 = vmatprep.subr.bf16.mxu0 0
        %1344 = vmatpush1.bf16.msra.mxu0 %v1236
        %1345 = vmatprep.subr.bf16.mxu0 0
        %1346 = vmatpush1.bf16.msra.mxu0 %v1237
        %1347 = vmatprep.subr.bf16.mxu0 0
        %1348 = vmatpush1.bf16.msra.mxu0 %v1238
        %1349 = vmatprep.subr.bf16.mxu0 0
        %1350 = vmatpush1.bf16.msra.mxu0 %v1239
        %1351 = vmatprep.subr.bf16.mxu0 0
        %1352 = vmatpush1.bf16.msra.mxu0 %v1240
        %1353 = vmatprep.mubr.bf16.mxu0 %v1022
        %1354 = vmatmul.mubr.bf16.gmra.mrb[0].mxu0 %v1021
        %v1355 = vpop.f32.mrb[0].mxu0
        %v1356 = vadd.f32 %v1001, %v1355
        %v1357 = vpop.f32.mrb[0].mxu0
        %v1358 = vpop.f32.mrb[0].mxu0
        %v1359 = vadd.f32 %v1001, %v1358
        %v1360 = vpop.f32.mrb[0].mxu0
        %1361 = vdwg.mxu0
        %1362 = vmatprep.subr.bf16.mxu0 0
        %1363 = vmatpush1.bf16.msra.mxu0 %v1241
        %1364 = vmatprep.subr.bf16.mxu0 0
        %1365 = vmatpush1.bf16.msra.mxu0 %v1242
        %1366 = vmatprep.subr.bf16.mxu0 0
        %1367 = vmatpush1.bf16.msra.mxu0 %v1243
        %1368 = vmatprep.subr.bf16.mxu0 0
        %1369 = vmatpush1.bf16.msra.mxu0 %v1244
        %1370 = vmatprep.subr.bf16.mxu0 0
        %1371 = vmatpush1.bf16.msra.mxu0 %v1245
        %1372 = vmatprep.subr.bf16.mxu0 0
        %1373 = vmatpush1.bf16.msra.mxu0 %v1246
        %1374 = vmatprep.subr.bf16.mxu0 0
        %1375 = vmatpush1.bf16.msra.mxu0 %v1247
        %1376 = vmatprep.subr.bf16.mxu0 0
        %1377 = vmatpush1.bf16.msra.mxu0 %v1248
        %1378 = vmatprep.subr.bf16.mxu0 0
        %1379 = vmatpush1.bf16.msra.mxu0 %v1249
        %1380 = vmatprep.subr.bf16.mxu0 0
        %1381 = vmatpush1.bf16.msra.mxu0 %v1250
        %1382 = vmatprep.subr.bf16.mxu0 0
        %1383 = vmatpush1.bf16.msra.mxu0 %v1251
        %1384 = vmatprep.subr.bf16.mxu0 0
        %1385 = vmatpush1.bf16.msra.mxu0 %v1252
        %1386 = vmatprep.subr.bf16.mxu0 0
        %1387 = vmatpush1.bf16.msra.mxu0 %v1253
        %1388 = vmatprep.subr.bf16.mxu0 0
        %1389 = vmatpush1.bf16.msra.mxu0 %v1254
        %1390 = vmatprep.subr.bf16.mxu0 0
        %1391 = vmatpush1.bf16.msra.mxu0 %v1255
        %1392 = vmatprep.subr.bf16.mxu0 0
        %1393 = vmatpush1.bf16.msra.mxu0 %v1256
        %1394 = vmatprep.mubr.bf16.mxu0 %v1024
        %1395 = vmatmul.mubr.bf16.gmra.mrb[0].mxu0 %v1023
        %v1396 = vpop.f32.mrb[0].mxu0
        %v1397 = vadd.f32 %v1356, %v1396
        %v1398 = vpop.f32.mrb[0].mxu0
        %v1399 = vpop.f32.mrb[0].mxu0
        %v1400 = vadd.f32 %v1359, %v1399
        %v1401 = vpop.f32.mrb[0].mxu0
        %1402 = vdwg.mxu0
        %1403 = vmatprep.subr.bf16.mxu0 0
        %1404 = vmatpush1.bf16.msra.mxu0 %v1257
        %1405 = vmatprep.subr.bf16.mxu0 0
        %1406 = vmatpush1.bf16.msra.mxu0 %v1258
        %1407 = vmatprep.subr.bf16.mxu0 0
        %1408 = vmatpush1.bf16.msra.mxu0 %v1259
        %1409 = vmatprep.subr.bf16.mxu0 0
        %1410 = vmatpush1.bf16.msra.mxu0 %v1260
        %1411 = vmatprep.subr.bf16.mxu0 0
        %1412 = vmatpush1.bf16.msra.mxu0 %v1261
        %1413 = vmatprep.subr.bf16.mxu0 0
        %1414 = vmatpush1.bf16.msra.mxu0 %v1262
        %1415 = vmatprep.subr.bf16.mxu0 0
        %1416 = vmatpush1.bf16.msra.mxu0 %v1263
        %1417 = vmatprep.subr.bf16.mxu0 0
        %1418 = vmatpush1.bf16.msra.mxu0 %v1264
        %1419 = vmatprep.subr.bf16.mxu0 0
        %1420 = vmatpush1.bf16.msra.mxu0 %v1265
        %1421 = vmatprep.subr.bf16.mxu0 0
        %1422 = vmatpush1.bf16.msra.mxu0 %v1266
        %1423 = vmatprep.subr.bf16.mxu0 0
        %1424 = vmatpush1.bf16.msra.mxu0 %v1267
        %1425 = vmatprep.subr.bf16.mxu0 0
        %1426 = vmatpush1.bf16.msra.mxu0 %v1268
        %1427 = vmatprep.subr.bf16.mxu0 0
        %1428 = vmatpush1.bf16.msra.mxu0 %v1269
        %1429 = vmatprep.subr.bf16.mxu0 0
        %1430 = vmatpush1.bf16.msra.mxu0 %v1270
        %1431 = vmatprep.subr.bf16.mxu0 0
        %1432 = vmatpush1.bf16.msra.mxu0 %v1271
        %1433 = vmatprep.subr.bf16.mxu0 0
        %1434 = vmatpush1.bf16.msra.mxu0 %v1272
        %1435 = vmatprep.mubr.bf16.mxu0 %v1026
        %1436 = vmatmul.mubr.bf16.gmra.mrb[0].mxu0 %v1025
        %v1437 = vpop.f32.mrb[0].mxu0
        %v1438 = vadd.f32 %v1397, %v1437
        %v1439 = vpop.f32.mrb[0].mxu0
        %v1440 = vpop.f32.mrb[0].mxu0
        %v1441 = vadd.f32 %v1400, %v1440
        %v1442 = vpop.f32.mrb[0].mxu0
        %1443 = vdwg.mxu0
        %v1444 = vld [vmem:[%s298] sm:$0xf]
        %v1445 = vld [vmem:[%s298 + $0x4] sm:$0xf]
        %v1446 = vunpack.c.l.bf16 %v1444
        %v1447 = vunpack.c.l.bf16 %v1445
        %v1448 = vrsqrt.pop %v1438
        %v1449 = vmul.f32 %v1438, %v1448
        %vm1450 = vcmp.eq.f32.partialorder %v1438, inf
        %v1451 = vsel %vm1450, %v1438, %v1449
        %vm1452 = vcmp.eq.f32.partialorder %v1438, 0.0
        %v1453 = vand.u32 %v1438, 2147483648
        %v1454 = vsel %vm1452, %v1453, %v1451
        %v1455 = vrsqrt.pop %v1441
        %v1456 = vmul.f32 %v1441, %v1455
        %vm1457 = vcmp.eq.f32.partialorder %v1441, inf
        %v1458 = vsel %vm1457, %v1441, %v1456
        %vm1459 = vcmp.eq.f32.partialorder %v1441, 0.0
        %v1460 = vand.u32 %v1441, 2147483648
        %v1461 = vsel %vm1459, %v1460, %v1458
        %v1462 = vmul.f32 %v1454, %v1446
        %v1463 = vmul.f32 %v1461, %v1447
        %v1464 = vadd.f32 %v888, %v1462
        %v1465 = vadd.f32 %v891, %v1463
        %1466 = vst [vmem:[%s339] sm:$0xff] %v1464
        %1467 = vst [vmem:[%s339 + $0x8] sm:$0xff] %v1465
        %s1468 = sand.u32 %s171, 1
        %s1469 = scalar_lea.sflag [#allocation4], %s1468
        %s1470 = sand.u32 %s171, 1
        %s1471 = smul.addr %s1470, 16
        %s1472 = scalar_lea.vmem [#allocation10], %s1471
        // Predicated region
        $region61: #{tpu_custom_call.1} parent=43 // pred_check
          %p1473 = pneg %p181
        $region62: #{tpu_custom_call.1} parent=43 // pred_check_branch
          %1475 = sbr.rel (%p1473) target = $region64
        $region63: #{tpu_custom_call.1} parent=43 // pred_region
          %s1476 = smul.u32 2, %s27
          %s1478 = ssub.s32 256, 256
          %1479 = vsyncadd %s1469, %s1478
          %s1480 = smul.addr %s1476, 128
          %s1481 = scalar_lea.hbm %s6, %s1480
          %s1482 = sshll.u32 %s1472, 4
          %s1483 = int_to_ptr.vmem [resolvable:$true] %s1482
          %1488 = dma.vmem_to_hbm [thread:$0]  %s1483, 256, %s1481, %s1469, 128, 128, 8
        $region64: #{tpu_custom_call.1} parent=43 // pred_fallthru
          _
      $region44: #{tpu_custom_call.1} parent=5 // pred_fallthru
        _
      %p1489 = scmp.le.s32.totalorder 2, %s22
      // Predicated region
      $region65: #{tpu_custom_call.1} parent=5 // pred_check
        %p1490 = pneg %p1489
      $region66: #{tpu_custom_call.1} parent=5 // pred_check_branch
        %1492 = sbr.rel (%p1490) target = $region68
      $region67: #{tpu_custom_call.1} parent=5 // pred_region
        %s1493 = ssub.s32 %s22, 2
        // Predicated region
        $region69: #{tpu_custom_call.1} parent=67 // pred_check
          %p1494 = pneg %p187
        $region70: #{tpu_custom_call.1} parent=67 // pred_check_branch
          %1496 = sbr.rel (%p1494) target = $region72
        $region71: #{tpu_custom_call.1} parent=67 // pred_region
          %s1497 = sand.u32 %s172, 1
          %s1498 = scalar_lea.sflag [#allocation4], %s1497
          %s1499 = sand.u32 %s172, 1
          %s1500 = smul.addr %s1499, 16
          %s1501 = scalar_lea.vmem [#allocation10], %s1500
          %1502 = dma.done %s1498, 256
        $region72: #{tpu_custom_call.1} parent=67 // pred_fallthru
          _
      $region68: #{tpu_custom_call.1} parent=5 // pred_fallthru
        _
    $region6: #{tpu_custom_call.1} parent=1 // loop_footer
      %s26 = sadd.s32 1, %s22
    $region7: #{tpu_custom_call.1} parent=1 // loop_footer_branch
      %21 = sbr.rel target = $region3
    $region8: #{tpu_custom_call.1} parent=1 // loop_exit
      _
    %1503 = vsyncpa [#allocation3], 1
    %s1504 = scalar_lea.sflag [#allocation3], 1
    %1505 = vsyncpa %s1504, 1
    %1506 = vsyncpa [#allocation6], 1
    %s1507 = scalar_lea.sflag [#allocation6], 1
    %1508 = vsyncpa %s1507, 1
    %1509 = vsyncpa [#allocation9], 1
    %1510 = vsyncpa [#allocation4], 1
    %s1511 = scalar_lea.sflag [#allocation4], 1
    %1512 = vsyncpa %s1511, 1

</llo_original>
